<compile_context>
chip_gen: v5e
topology: v5e:2x2
jax: 0.10.0
libtpu: 0.0.40
codegen_flags: <defaults>
</compile_context>

<pallas_src>
import functools

import jax
import jax.numpy as jnp
from jax import lax
from jax.experimental import pallas as pl
from jax.experimental.pallas import tpu as pltpu

THRESHOLD = 0.03
INV_THRESHOLD = 1.0 / THRESHOLD
WEIGHT = 0.1
EPS = 1e-6  # torch.pairwise_distance default

MAX_BLOCK_BYTES = 4 * 1024 * 1024    # per-input block target (~85%+ of HBM roofline)
VMEM_LIMIT_BYTES = 40 * 1024 * 1024  # 2 inputs x 2 bufs x 4 MiB << limit; v7x-safe


def _attack_loss_kernel(x1_ref, x2_ref, o_ref, *, tile_b, true_b, needs_mask):
    i = pl.program_id(0)

    # Hot path: elementwise diff, squared-sum over the feature (lane) axis,
    # sqrt (EUP), threshold select, one cross-sublane reduce per tile.
    x1 = x1_ref[...].astype(jnp.float32)
    x2 = x2_ref[...].astype(jnp.float32)
    diff = x1 - x2 + EPS
    sq_sum = jnp.sum(diff * diff, axis=-1, keepdims=True)            # (tile_b, 1)
    dist = jnp.sqrt(sq_sum)                                          # (tile_b, 1)
    loss = jnp.where(dist > THRESHOLD, dist * INV_THRESHOLD, 0.0)    # (tile_b, 1)

    if needs_mask:
        # Last tile is partial: rows >= true_b contain stale VMEM garbage.
        # A select zeroes them (NaN/Inf cannot leak through jnp.where).
        row = i * tile_b + lax.broadcasted_iota(jnp.int32, (tile_b, 1), 0)
        loss = jnp.where(row < true_b, loss, 0.0)

    o_ref[...] = jnp.sum(loss).reshape(1, 1, 1)


def attack_loss(x1, x2, *, max_block_bytes=MAX_BLOCK_BYTES):
    """Pallas implementation of AttackLoss.forward. x1, x2: [..., D]."""
    assert x1.shape == x2.shape
    D = x1.shape[-1]
    x1 = x1.reshape(-1, D)
    x2 = x2.reshape(-1, D)
    B = x1.shape[0]

    # Largest batch tile (multiple of 8 rows) whose input block stays under
    # the per-block VMEM target.  If the whole batch fits in one tile, use the
    # full array as the block (always layout-legal, no masking needed).
    bytes_per_row = D * jnp.dtype(x1.dtype).itemsize
    cap_rows = max(8, (max_block_bytes // bytes_per_row) // 8 * 8)
    tile_b = B if B <= cap_rows else cap_rows
    n_tiles = pl.cdiv(B, tile_b)
    needs_mask = (B % tile_b) != 0
    # TODO(synk): for very large D (single row > block budget), add a second
    # "arbitrary" grid axis over D with a per-row squared-sum accumulator.

    kernel = functools.partial(
        _attack_loss_kernel, tile_b=tile_b, true_b=B, needs_mask=needs_mask,
    )

    partials = pl.pallas_call(
        kernel,
        out_shape=jax.ShapeDtypeStruct((n_tiles, 1, 1), jnp.float32),
        grid_spec=pltpu.PrefetchScalarGridSpec(
            num_scalar_prefetch=0,
            grid=(n_tiles,),
            in_specs=[pl.BlockSpec((tile_b, D), lambda i: (i, 0)),
                      pl.BlockSpec((tile_b, D), lambda i: (i, 0))],
            out_specs=pl.BlockSpec((1, 1, 1), lambda i: (i, 0, 0)),
        ),
        compiler_params=pltpu.CompilerParams(
            dimension_semantics=("parallel",),
            vmem_limit_bytes=VMEM_LIMIT_BYTES,
        ),
    )(x1, x2)

    # Tiny n_tiles-element reduction + scale in XLA; true batch size as denom.
    return (WEIGHT / B) * jnp.sum(partials)


def attack_loss_ref(x1, x2):
    """Pure-JAX reference mirroring torch.pairwise_distance semantics."""
    D = x1.shape[-1]
    x1 = x1.reshape(-1, D)
    x2 = x2.reshape(-1, D)
    diff = x1.astype(jnp.float32) - x2.astype(jnp.float32) + EPS
    dist = jnp.sqrt(jnp.sum(diff * diff, axis=-1))
    loss = jnp.where(dist > THRESHOLD, dist * INV_THRESHOLD, 0.0)
    return WEIGHT * jnp.mean(loss)


if __name__ == "__main__":
    key = jax.random.PRNGKey(0)

    # Case 1: small, lane-aligned, single-tile batch.
    k1, k2 = jax.random.split(key)
    B, D = 16, 128
    x1 = jax.random.normal(k1, (B, D), dtype=jnp.float32)
    x2 = x1 + 0.01 * jax.random.normal(k2, (B, D), dtype=jnp.float32)
    out = jax.block_until_ready(attack_loss(x1, x2))
    ref = attack_loss_ref(x1, x2)
    assert jnp.allclose(out, ref, rtol=1e-5, atol=1e-6), (out, ref)

    # Case 2: ragged batch / non-128 feature dim, whole batch in one full-array block.
    k3, k4 = jax.random.split(k1)
    B2, D2 = 100, 96
    y1 = jax.random.normal(k3, (B2, D2), dtype=jnp.float32)
    y2 = y1 + 0.05 * jax.random.normal(k4, (B2, D2), dtype=jnp.float32)
    out2 = jax.block_until_ready(attack_loss(y1, y2))
    ref2 = attack_loss_ref(y1, y2)
    assert jnp.allclose(out2, ref2, rtol=1e-5, atol=1e-6), (out2, ref2)

    # Case 3: force a small tile so the multi-tile + partial-last-block +
    # in-kernel row-mask path is exercised at small shapes.
    out3 = jax.block_until_ready(
        attack_loss(y1, y2, max_block_bytes=16 * D2 * 4))  # tile_b = 16, 7 tiles
    assert jnp.allclose(out3, ref2, rtol=1e-5, atol=1e-6), (out3, ref2)

    print("KERNEL_OK")
</pallas_src>

<mosaic_0001>
module attributes {stable_mosaic.version = 11 : i64} {
  func.func @_attack_loss_kernel(%arg0: i32, %arg1: memref<16x128xf32, #tpu.memory_space<vmem>>, %arg2: memref<16x128xf32, #tpu.memory_space<vmem>>, %arg3: memref<1x1x1xf32, #tpu.memory_space<vmem>>) attributes {dimension_semantics = [#tpu.dimension_semantics<parallel>], iteration_bounds = array<i64: 1>, scalar_prefetch = 0 : i64, scratch_operands = 0 : i64, tpu.core_type = #tpu.core_type<tc>, window_params = [{transform_indices = @transform_0, window_bounds = array<i64: 16, 128>}, {transform_indices = @transform_1, window_bounds = array<i64: 16, 128>}, {transform_indices = @transform_2, window_bounds = array<i64: 1, 1, 1>}]} {
    %c0 = arith.constant 0 : index
    %c0_0 = arith.constant 0 : index
    %0 = vector.load %arg1[%c0, %c0_0] : memref<16x128xf32, #tpu.memory_space<vmem>>, vector<16x128xf32>
    %c0_1 = arith.constant 0 : index
    %c0_2 = arith.constant 0 : index
    %1 = vector.load %arg2[%c0_1, %c0_2] : memref<16x128xf32, #tpu.memory_space<vmem>>, vector<16x128xf32>
    %2 = arith.subf %0, %1 : vector<16x128xf32>
    %cst = arith.constant 9.99999997E-7 : f32
    %3 = vector.broadcast %cst : f32 to vector<16x128xf32>
    %4 = arith.addf %2, %3 : vector<16x128xf32>
    %5 = arith.mulf %4, %4 : vector<16x128xf32>
    %cst_3 = arith.constant dense<0.000000e+00> : vector<16xf32>
    %6 = vector.multi_reduction <add>, %5, %cst_3 [1] : vector<16x128xf32> to vector<16xf32>
    %7 = vector.shape_cast %6 : vector<16xf32> to vector<16x1xf32>
    %8 = math.sqrt %7 : vector<16x1xf32>
    %cst_4 = arith.constant 3.000000e-02 : f32
    %9 = vector.broadcast %cst_4 : f32 to vector<16x1xf32>
    %10 = arith.cmpf ogt, %8, %9 : vector<16x1xf32>
    %cst_5 = arith.constant 33.3333321 : f32
    %11 = vector.broadcast %cst_5 : f32 to vector<16x1xf32>
    %12 = arith.mulf %8, %11 : vector<16x1xf32>
    %cst_6 = arith.constant 0.000000e+00 : f32
    %13 = vector.broadcast %cst_6 : f32 to vector<16x1xf32>
    %14 = arith.select %10, %12, %13 : vector<16x1xi1>, vector<16x1xf32>
    %15 = vector.shape_cast %14 : vector<16x1xf32> to vector<1x16x1xf32>
    %cst_7 = arith.constant dense<0.000000e+00> : vector<1xf32>
    %16 = vector.multi_reduction <add>, %15, %cst_7 [1, 2] : vector<1x16x1xf32> to vector<1xf32>
    %17 = vector.shape_cast %16 : vector<1xf32> to vector<1x1x1xf32>
    %18 = vector.extract %17[0, 0, 0] : f32 from vector<1x1x1xf32>
    %19 = vector.broadcast %18 : f32 to vector<1x1x1xf32>
    %c0_8 = arith.constant 0 : index
    %c0_9 = arith.constant 0 : index
    %c0_10 = arith.constant 0 : index
    %20 = vector.load %arg3[%c0_8, %c0_9, %c0_10] : memref<1x1x1xf32, #tpu.memory_space<vmem>>, vector<1x1x1xf32>
    tpu.vector_store %arg3[%c0_8, %c0_9, %c0_10], %19 {strides = array<i32>} : memref<1x1x1xf32, #tpu.memory_space<vmem>>, vector<1x1x1xf32>,
    return
  }
  func.func @transform_0(%arg0: i32) -> (i32, i32) {
    %c0_i32 = arith.constant 0 : i32
    %c0_i32_0 = arith.constant 0 : i32
    return %arg0, %c0_i32 : i32, i32
  }
  func.func @transform_1(%arg0: i32) -> (i32, i32) {
    %c0_i32 = arith.constant 0 : i32
    %c0_i32_0 = arith.constant 0 : i32
    return %arg0, %c0_i32 : i32, i32
  }
  func.func @transform_2(%arg0: i32) -> (i32, i32, i32) {
    %c0_i32 = arith.constant 0 : i32
    %c0_i32_0 = arith.constant 0 : i32
    %c0_i32_1 = arith.constant 0 : i32
    return %arg0, %c0_i32, %c0_i32_0 : i32, i32, i32
  }
}

</mosaic_0001>

<llo_original>
// kernel: tpu_custom_call.1
$region0: #{tpu_custom_call.1}
  #allocation0 [shape = 'u32[]', space=smem, size = 0x4, offset = 0x4, fixed_abs, tag = 'smem constant byte address 0x4 - core index']
  #allocation1 [shape = 'u32[72,128]{1,0:T(1,128)}', space=vmem, size = 0x9000, scoped, tag = 'internal scratch']
  %s0 = inlined_call_operand.hbm [shape: f32[16,128], index: 0, kind: input, shape index: {}]
  %s1 = inlined_call_operand.hbm [shape: f32[16,128], index: 1, kind: input, shape index: {}]
  %s2 = inlined_call_operand.hbm [shape: f32[1,1,1], index: 2, kind: output, shape index: {}]
  %s3 = sld [smem:[#allocation0]]
  $region26: #{tpu_custom_call.1} parent=0
    _
  %s5 = ssub.s32 1, %s3
  %s6 = scalar_select 0, %s5, %s3
  $region1: #{tpu_custom_call.1} parent=0
    #allocation2 [shape = 'u8[8192]{0}', space=vmem, size = 0x2000, scoped, tag = 'input window, operand 0, single buffered']
    #allocation3 [shape = 's32[1]{0}', space=sflag, size = 0x4, scoped, tag = 'scoped memory for tpu_custom_call.1']
    #allocation4 [shape = 's32[1]{0}', space=sflag, size = 0x4, scoped, tag = 'scoped memory for tpu_custom_call.1']
    #allocation5 [shape = 'u8[8192]{0}', space=vmem, size = 0x2000, scoped, tag = 'input window, operand 1, single buffered']
    #allocation6 [shape = 's32[1]{0}', space=sflag, size = 0x4, scoped, tag = 'scoped memory for tpu_custom_call.1']
    #allocation7 [shape = 'u8[512]{0}', space=vmem, size = 0x400, scoped, tag = 'output window, operand 0, single buffered']
    %7 = vsyncpa [#allocation3], 0
    %8 = vsyncpa [#allocation6], 0
    %9 = vsyncpa [#allocation4], 0
    // Predicated region
    $region2: #{tpu_custom_call.1} parent=1 // pred_check
      _
    $region3: #{tpu_custom_call.1} parent=1 // pred_check_branch
      %11 = sbr.rel (0) target = $region5
    $region4: #{tpu_custom_call.1} parent=1 // pred_region
      %13 = vsyncadd [#allocation3], 0
      %s14 = sshll.u32 %s0, 4
      %s15 = int_to_ptr.hbm [resolvable:$true] %s14
      %s16 = sshll.u32 [#allocation2], 4
      %s17 = int_to_ptr.vmem [resolvable:$true] %s16
      %22 = dma.hbm_to_vmem [thread:$0]  %s15, 256, %s17, [#allocation3], 128, 128, 8
    $region5: #{tpu_custom_call.1} parent=1 // pred_fallthru
      _
    // Predicated region
    $region6: #{tpu_custom_call.1} parent=1 // pred_check
      _
    $region7: #{tpu_custom_call.1} parent=1 // pred_check_branch
      %24 = sbr.rel (0) target = $region9
    $region8: #{tpu_custom_call.1} parent=1 // pred_region
      %26 = vsyncadd [#allocation6], 0
      %s27 = sshll.u32 %s1, 4
      %s28 = int_to_ptr.hbm [resolvable:$true] %s27
      %s29 = sshll.u32 [#allocation5], 4
      %s30 = int_to_ptr.vmem [resolvable:$true] %s29
      %35 = dma.hbm_to_vmem [thread:$0]  %s28, 256, %s30, [#allocation6], 128, 128, 8
    $region9: #{tpu_custom_call.1} parent=1 // pred_fallthru
      _
    // Predicated region
    $region10: #{tpu_custom_call.1} parent=1 // pred_check
      _
    $region11: #{tpu_custom_call.1} parent=1 // pred_check_branch
      %37 = sbr.rel (0) target = $region13
    $region12: #{tpu_custom_call.1} parent=1 // pred_region
      %39 = dma.done [#allocation3], 256
    $region13: #{tpu_custom_call.1} parent=1 // pred_fallthru
      _
    // Predicated region
    $region14: #{tpu_custom_call.1} parent=1 // pred_check
      _
    $region15: #{tpu_custom_call.1} parent=1 // pred_check_branch
      %41 = sbr.rel (0) target = $region17
    $region16: #{tpu_custom_call.1} parent=1 // pred_region
      %43 = dma.done [#allocation6], 256
    $region17: #{tpu_custom_call.1} parent=1 // pred_fallthru
      _
    %v44 = vld [vmem:[#allocation2] sm:$0xff]
    %v45 = vld [vmem:[#allocation2 + $0x8] sm:$0xff]
    %v46 = vld [vmem:[#allocation5] sm:$0xff]
    %v47 = vld [vmem:[#allocation5 + $0x8] sm:$0xff]
    %v48 = vsub.f32 %v44, %v46
    %v49 = vsub.f32 %v45, %v47
    %v50 = vadd.f32 %v48, 1e-06
    %v51 = vadd.f32 %v49, 1e-06
    %v52 = vmul.f32 %v50, %v50
    %v53 = vmul.f32 %v51, %v51
    %54 = vadd.xlane.f32.xlu0 %v52
    %v55 = vpop.xlane.xlu0 %54
    %56 = vadd.xlane.f32.xlu0 %v53
    %v57 = vpop.xlane.xlu0 %56
    %v58 = vrsqrt.pop %v55
    %v59 = vmul.f32 %v58, %v55
    %v60 = vmul.f32 %v59, %v58
    %v61 = vmul.f32 0.5, %v60
    %v62 = vsub.f32 1.5, %v61
    %v63 = vmul.f32 %v58, %v62
    %v64 = vmul.f32 %v55, %v63
    %vm65 = vcmp.eq.f32.partialorder %v55, inf
    %v66 = vsel %vm65, %v55, %v64
    %vm67 = vcmp.eq.f32.partialorder %v55, 0.0
    %v68 = vand.u32 %v55, 2147483648
    %v69 = vsel %vm67, %v68, %v66
    %v70 = vrsqrt.pop %v57
    %v71 = vmul.f32 %v70, %v57
    %v72 = vmul.f32 %v71, %v70
    %v73 = vmul.f32 0.5, %v72
    %v74 = vsub.f32 1.5, %v73
    %v75 = vmul.f32 %v70, %v74
    %v76 = vmul.f32 %v57, %v75
    %vm77 = vcmp.eq.f32.partialorder %v57, inf
    %v78 = vsel %vm77, %v57, %v76
    %vm79 = vcmp.eq.f32.partialorder %v57, 0.0
    %v80 = vand.u32 %v57, 2147483648
    %v81 = vsel %vm79, %v80, %v78
    %vm82 = vcmp.gt.f32.partialorder %v69, 0.03
    %vm83 = vcmp.gt.f32.partialorder %v81, 0.03
    %v84 = vmul.f32 %v69, 33.333332
    %v85 = vmul.f32 %v81, 33.333332
    %v86 = vsel %vm82, %v84, 0.0
    %v87 = vsel %vm83, %v85, 0.0
    %vm88 = vcmask 7168
    %v89 = vsel %vm88, %v86, 0.0
    %v90 = vsel %vm88, %v87, 0.0
    %v91 = vadd.f32 %v89, %v90
    %92 = vadd.xlane.f32.xlu0 %v91
    %v93 = vpop.xlane.xlu0 %92
    %v94 = vrot.slane %v93, 4
    %v95 = vadd.f32 %v93, %v94
    %v96 = vrot.slane %v95, 2
    %v97 = vadd.f32 %v95, %v96
    %v98 = vrot.slane %v97, 1
    %v99 = vadd.f32 %v97, %v98
    %s100 = vtos %v99
    %v101 = vstv %s100
    %vm102 = vcmask 0
    %103 = vst.msk [vmem:[#allocation7] sm:$0x1] %vm102, %v101
    // Predicated region
    $region18: #{tpu_custom_call.1} parent=1 // pred_check
      _
    $region19: #{tpu_custom_call.1} parent=1 // pred_check_branch
      %105 = sbr.rel (0) target = $region21
    $region20: #{tpu_custom_call.1} parent=1 // pred_region
      %107 = vsyncadd [#allocation4], 0
      %s109 = sshll.u32 [#allocation7], 4
      %s110 = int_to_ptr.vmem [resolvable:$true] %s109
      %s111 = sshll.u32 %s2, 4
      %s112 = int_to_ptr.hbm [resolvable:$true] %s111
      %114 = dma.vmem_to_hbm [thread:$0]  %s110, 16, %s112, [#allocation4]
    $region21: #{tpu_custom_call.1} parent=1 // pred_fallthru
      _
    // Predicated region
    $region22: #{tpu_custom_call.1} parent=1 // pred_check
      _
    $region23: #{tpu_custom_call.1} parent=1 // pred_check_branch
      %116 = sbr.rel (0) target = $region25
    $region24: #{tpu_custom_call.1} parent=1 // pred_region
      %118 = dma.done [#allocation4], 16
    $region25: #{tpu_custom_call.1} parent=1 // pred_fallthru
      _
    %119 = vsyncpa [#allocation3], 1
    %120 = vsyncpa [#allocation6], 1
    %121 = vsyncpa [#allocation4], 1

</llo_original>
